<compile_context>
chip_gen: v7x
topology: tpu7x:2x2x1
jax: 0.10.0
libtpu: 0.0.40
codegen_flags: <defaults>
</compile_context>

<pallas_src>
import math

import jax
import jax.numpy as jnp
from jax.experimental import pallas as pl
from jax.experimental.pallas import tpu as pltpu

IN_FEATURES = 100
OUT_FEATURES = 100
TILE_R = 2048       # max rows per grid step (~3.7 MiB double-buffered f32)
SPLIT_ROWS = 512    # above this, force >= 2 grid steps (v7x megacore)


def _round_up(x, m):
    return (x + m - 1) // m * m


def linear_relu_kernel(x_ref, wt_ref, b_ref, o_ref):
    # x_ref : (tile_r, IN_FEATURES)        activation row tile
    # wt_ref: (IN_FEATURES, OUT_FEATURES)  pre-transposed weight (VMEM resident)
    # b_ref : (1, OUT_FEATURES)            bias (VMEM resident)
    # o_ref : (tile_r, OUT_FEATURES)       output tile, stored directly (no pad)
    y = jnp.dot(x_ref[...], wt_ref[...], preferred_element_type=jnp.float32)
    y = y + b_ref[...]
    o_ref[...] = jnp.maximum(y, 0.0).astype(o_ref.dtype)


def prepare_params(weight, bias):
    """One-time parameter prep.

    weight: (OUT_FEATURES, IN_FEATURES) like torch.nn.Linear.weight
    bias:   (OUT_FEATURES,)
    Returns w_t (IN_FEATURES, OUT_FEATURES), b_row (1, OUT_FEATURES).
    """
    return weight.T, bias.reshape(1, OUT_FEATURES)


def _pick_tile_r(rows):
    if rows <= 8:
        # Full-extent block: no row padding needed, single grid step.
        return rows
    if rows <= TILE_R:
        if rows >= SPLIT_ROWS:
            # Ensure >= 2 grid steps so both v7x TensorCores get work.
            return _round_up(pl.cdiv(rows, 2), 8)
        # Single (possibly partial) block; row dim kept a multiple of 8.
        return _round_up(rows, 8)
    return TILE_R


def model_forward(x, w_t, b_row):
    """relu(x @ W.T + b) for x of shape (..., IN_FEATURES)."""
    lead = x.shape[:-1]
    rows = int(math.prod(lead)) if lead else 1
    x2d = x.reshape(rows, IN_FEATURES)

    tile_r = _pick_tile_r(rows)
    grid = (pl.cdiv(rows, tile_r),)

    cost = pl.CostEstimate(
        flops=2 * rows * IN_FEATURES * OUT_FEATURES,
        transcendentals=0,
        bytes_accessed=4 * (rows * IN_FEATURES
                            + IN_FEATURES * OUT_FEATURES
                            + OUT_FEATURES
                            + rows * OUT_FEATURES),
    )

    out = pl.pallas_call(
        linear_relu_kernel,
        out_shape=jax.ShapeDtypeStruct((rows, OUT_FEATURES), x.dtype),
        grid=grid,
        in_specs=[
            pl.BlockSpec((tile_r, IN_FEATURES), lambda i: (i, 0)),
            pl.BlockSpec((IN_FEATURES, OUT_FEATURES), lambda i: (0, 0)),  # resident
            pl.BlockSpec((1, OUT_FEATURES), lambda i: (0, 0)),            # resident
        ],
        out_specs=pl.BlockSpec((tile_r, OUT_FEATURES), lambda i: (i, 0)),
        compiler_params=pltpu.CompilerParams(
            dimension_semantics=("parallel",),
        ),
        cost_estimate=cost,
    )(x2d, w_t, b_row)

    return out.reshape(*lead, OUT_FEATURES)


if __name__ == "__main__":
    key = jax.random.PRNGKey(0)
    k_x, k_x2, k_w, k_b = jax.random.split(key, 4)

    # Same init scheme as torch.nn.Linear: U(-1/sqrt(in), 1/sqrt(in))
    bound = 1.0 / (IN_FEATURES ** 0.5)
    weight = jax.random.uniform(
        k_w, (OUT_FEATURES, IN_FEATURES), jnp.float32, minval=-bound, maxval=bound
    )
    bias = jax.random.uniform(
        k_b, (OUT_FEATURES,), jnp.float32, minval=-bound, maxval=bound
    )

    # One-time parameter prep (transpose, bias reshape).
    w_t, b_row = prepare_params(weight, bias)

    # Small features-last input consistent with Linear(100, 100).
    x = jax.random.normal(k_x, (2, 8, IN_FEATURES), jnp.float32)
    out = jax.block_until_ready(model_forward(x, w_t, b_row))
    ref = jnp.maximum(jnp.einsum("...i,oi->...o", x, weight) + bias, 0.0)
    assert out.shape == (2, 8, OUT_FEATURES)
    assert jnp.allclose(out, ref, atol=1e-4, rtol=1e-4)

    # Ragged (non-multiple-of-8) row count exercises the partial trailing block
    # path that replaced the old jnp.pad-based row padding.
    x2 = jax.random.normal(k_x2, (3, 7, IN_FEATURES), jnp.float32)
    out2 = jax.block_until_ready(model_forward(x2, w_t, b_row))
    ref2 = jnp.maximum(jnp.einsum("...i,oi->...o", x2, weight) + bias, 0.0)
    assert out2.shape == (3, 7, OUT_FEATURES)
    assert jnp.allclose(out2, ref2, atol=1e-4, rtol=1e-4)

    print("KERNEL_OK")
</pallas_src>

<mosaic_0001>
module attributes {stable_mosaic.version = 11 : i64} {
  func.func @linear_relu_kernel(%arg0: i32, %arg1: memref<16x100xf32, #tpu.memory_space<vmem>>, %arg2: memref<100x100xf32, #tpu.memory_space<vmem>>, %arg3: memref<1x100xf32, #tpu.memory_space<vmem>>, %arg4: memref<16x100xf32, #tpu.memory_space<vmem>>) attributes {dimension_semantics = [#tpu.dimension_semantics<parallel>], iteration_bounds = array<i64: 1>, scalar_prefetch = 0 : i64, scratch_operands = 0 : i64, tpu.core_type = #tpu.core_type<tc>, window_params = [{transform_indices = @transform_0, window_bounds = array<i64: 16, 100>}, {pipeline_mode = #tpu.pipeline_mode<synchronous>, transform_indices = @transform_1, window_bounds = array<i64: 100, 100>}, {pipeline_mode = #tpu.pipeline_mode<synchronous>, transform_indices = @transform_2, window_bounds = array<i64: 1, 100>}, {transform_indices = @transform_3, window_bounds = array<i64: 16, 100>}]} {
    %c0 = arith.constant 0 : index
    %c0_0 = arith.constant 0 : index
    %0 = vector.load %arg1[%c0, %c0_0] : memref<16x100xf32, #tpu.memory_space<vmem>>, vector<16x100xf32>
    %c0_1 = arith.constant 0 : index
    %c0_2 = arith.constant 0 : index
    %1 = vector.load %arg2[%c0_1, %c0_2] : memref<100x100xf32, #tpu.memory_space<vmem>>, vector<100x100xf32>
    %cst = arith.constant dense<0.000000e+00> : vector<16x100xf32>
    %2 = tpu.matmul %0, %1, %cst {dimension_numbers = #tpu.dot_dimension_numbers<[1], [0], [0], [1], [0, 0, 1, 1], [], []>} : vector<16x100xf32>, vector<100x100xf32>, vector<16x100xf32> -> vector<16x100xf32>
    %c0_3 = arith.constant 0 : index
    %c0_4 = arith.constant 0 : index
    %3 = vector.load %arg3[%c0_3, %c0_4] : memref<1x100xf32, #tpu.memory_space<vmem>>, vector<1x100xf32>
    %4 = vector.broadcast %3 : vector<1x100xf32> to vector<16x100xf32>
    %5 = arith.addf %2, %4 : vector<16x100xf32>
    %cst_5 = arith.constant 0.000000e+00 : f32
    %6 = vector.broadcast %cst_5 : f32 to vector<16x100xf32>
    %7 = arith.maximumf %5, %6 : vector<16x100xf32>
    %c0_6 = arith.constant 0 : index
    %c0_7 = arith.constant 0 : index
    %8 = vector.load %arg4[%c0_6, %c0_7] : memref<16x100xf32, #tpu.memory_space<vmem>>, vector<16x100xf32>
    tpu.vector_store %arg4[%c0_6, %c0_7], %7 {strides = array<i32>} : memref<16x100xf32, #tpu.memory_space<vmem>>, vector<16x100xf32>,
    return
  }
  func.func @transform_0(%arg0: i32) -> (i32, i32) {
    %c0_i32 = arith.constant 0 : i32
    %c0_i32_0 = arith.constant 0 : i32
    return %arg0, %c0_i32 : i32, i32
  }
  func.func @transform_1(%arg0: i32) -> (i32, i32) {
    %c0_i32 = arith.constant 0 : i32
    %c0_i32_0 = arith.constant 0 : i32
    %c0_i32_1 = arith.constant 0 : i32
    return %c0_i32, %c0_i32_0 : i32, i32
  }
  func.func @transform_2(%arg0: i32) -> (i32, i32) {
    %c0_i32 = arith.constant 0 : i32
    %c0_i32_0 = arith.constant 0 : i32
    %c0_i32_1 = arith.constant 0 : i32
    return %c0_i32, %c0_i32_0 : i32, i32
  }
  func.func @transform_3(%arg0: i32) -> (i32, i32) {
    %c0_i32 = arith.constant 0 : i32
    %c0_i32_0 = arith.constant 0 : i32
    return %arg0, %c0_i32 : i32, i32
  }
}

</mosaic_0001>

<llo_original>
// kernel: tpu_custom_call.1
$region0: #{tpu_custom_call.1}
  #allocation0 [shape = 'u32[]', space=smem, size = 0x4, offset = 0x4, fixed_abs, tag = 'smem constant byte address 0x4 - core index']
  #allocation1 [shape = 'u32[144,128]{1,0:T(1,128)}', space=vmem, size = 0x12000, scoped, tag = 'internal scratch']
  %s0 = inlined_call_operand.hbm [shape: f32[16,100], index: 0, kind: input, shape index: {}]
  %s1 = inlined_call_operand.hbm [shape: f32[100,100], index: 1, kind: input, shape index: {}]
  %s2 = inlined_call_operand.vmem [shape: f32[1,100], index: 2, kind: input, shape index: {}]
  %s3 = inlined_call_operand.hbm [shape: f32[16,100], index: 3, kind: output, shape index: {}]
  %s4 = sld [smem:[#allocation0]]
  $region30: #{tpu_custom_call.1} parent=0
    _
  %s6 = ssub.s32 1, %s4
  %s7 = scalar_select 0, %s6, %s4
  $region1: #{tpu_custom_call.1} parent=0
    #allocation2 [shape = 'u8[8192]{0}', space=vmem, size = 0x2000, scoped, tag = 'input window, operand 0, single buffered']
    #allocation3 [shape = 's32[1]{0}', space=sflag, size = 0x4, scoped, tag = 'scoped memory for tpu_custom_call.1']
    #allocation4 [shape = 's32[1]{0}', space=sflag, size = 0x4, scoped, tag = 'scoped memory for tpu_custom_call.1']
    #allocation5 [shape = 'u8[53248]{0}', space=vmem, size = 0xd000, scoped, tag = 'input window, operand 1, single buffered']
    #allocation6 [shape = 's32[1]{0}', space=sflag, size = 0x4, scoped, tag = 'scoped memory for tpu_custom_call.1']
    #allocation7 [shape = 'u8[8192]{0}', space=vmem, size = 0x2000, scoped, tag = 'output window, operand 0, single buffered']
    %8 = vsyncpa [#allocation3], 0
    %9 = vsyncpa [#allocation6], 0
    %10 = vsyncpa [#allocation4], 0
    // Predicated region
    $region2: #{tpu_custom_call.1} parent=1 // pred_check
      _
    $region3: #{tpu_custom_call.1} parent=1 // pred_check_branch
      %12 = sbr.rel (0) target = $region5
    $region4: #{tpu_custom_call.1} parent=1 // pred_region
      %s14 = ssub.s32 256, 256
      %15 = vsyncadd [#allocation3], %s14
      %s16 = sshll.u32 [#allocation2], 4
      %s17 = int_to_ptr.vmem [resolvable:$true] %s16
      %22 = dma.hbm_to_vmem [thread:$0]  %s0, 256, %s17, [#allocation3], 128, 128, 8
    $region5: #{tpu_custom_call.1} parent=1 // pred_fallthru
      _
    // Predicated region
    $region6: #{tpu_custom_call.1} parent=1 // pred_check
      _
    $region7: #{tpu_custom_call.1} parent=1 // pred_check_branch
      %24 = sbr.rel (0) target = $region9
    $region8: #{tpu_custom_call.1} parent=1 // pred_region
      %s26 = ssub.s32 1664, 1664
      %27 = vsyncadd [#allocation6], %s26
      %s28 = sshll.u32 [#allocation5], 4
      %s29 = int_to_ptr.vmem [resolvable:$true] %s28
      %34 = dma.hbm_to_vmem [thread:$0]  %s1, 1664, %s29, [#allocation6], 128, 128, 8
    $region9: #{tpu_custom_call.1} parent=1 // pred_fallthru
      _
    // Predicated region
    $region10: #{tpu_custom_call.1} parent=1 // pred_check
      _
    $region11: #{tpu_custom_call.1} parent=1 // pred_check_branch
      %36 = sbr.rel (0) target = $region13
    $region12: #{tpu_custom_call.1} parent=1 // pred_region
      _
    $region13: #{tpu_custom_call.1} parent=1 // pred_fallthru
      _
    // Predicated region
    $region14: #{tpu_custom_call.1} parent=1 // pred_check
      _
    $region15: #{tpu_custom_call.1} parent=1 // pred_check_branch
      %38 = sbr.rel (0) target = $region17
    $region16: #{tpu_custom_call.1} parent=1 // pred_region
      %39 = dma.done [#allocation3], 256
    $region17: #{tpu_custom_call.1} parent=1 // pred_fallthru
      _
    // Predicated region
    $region18: #{tpu_custom_call.1} parent=1 // pred_check
      _
    $region19: #{tpu_custom_call.1} parent=1 // pred_check_branch
      %41 = sbr.rel (0) target = $region21
    $region20: #{tpu_custom_call.1} parent=1 // pred_region
      %42 = dma.done [#allocation6], 1664
    $region21: #{tpu_custom_call.1} parent=1 // pred_fallthru
      _
    %v43 = vld [vmem:[#allocation2] sm:$0xff]
    %v44 = vld [vmem:[#allocation2 + $0x8] sm:$0xff]
    %v45 = vld [vmem:[#allocation5] sm:$0xff]
    %v46 = vld [vmem:[#allocation5 + $0x8] sm:$0xff]
    %v47 = vld [vmem:[#allocation5 + $0x10] sm:$0xff]
    %v48 = vld [vmem:[#allocation5 + $0x18] sm:$0xff]
    %v49 = vld [vmem:[#allocation5 + $0x20] sm:$0xff]
    %v50 = vld [vmem:[#allocation5 + $0x28] sm:$0xff]
    %v51 = vld [vmem:[#allocation5 + $0x30] sm:$0xff]
    %v52 = vld [vmem:[#allocation5 + $0x38] sm:$0xff]
    %v53 = vld [vmem:[#allocation5 + $0x40] sm:$0xff]
    %v54 = vld [vmem:[#allocation5 + $0x48] sm:$0xff]
    %v55 = vld [vmem:[#allocation5 + $0x50] sm:$0xff]
    %v56 = vld [vmem:[#allocation5 + $0x58] sm:$0xff]
    %v57 = vld [vmem:[#allocation5 + $0x60] sm:$0xf]
    %v58 = vld [vmem:[%s2] sm:$0x1]
    %v60 = vlaneseq
    %v61 = vshrl.u32 %v60, 7
    %v62 = vsub.s32 0, %v61
    %v63 = vrot.slane %v58, %v62
    %vm65 = vcmask 818176
    %v67 = vsel %vm65, %v43, 0
    %v70 = vsel %vm65, %v44, 0
    %vm72 = vcmask 1043456
    %v74 = vsel %vm72, %v57, 0
    %76 = vmatprep.subr.mxu0 0.0
    %77 = vmatpush1.msra.mxu0 %v45
    %78 = vmatprep.subr.mxu0 0.0
    %79 = vmatpush1.msra.mxu0 %v46
    %80 = vmatprep.subr.mxu0 0.0
    %81 = vmatpush1.msra.mxu0 %v47
    %82 = vmatprep.subr.mxu0 0.0
    %83 = vmatpush1.msra.mxu0 %v48
    %84 = vmatprep.subr.mxu0 0.0
    %85 = vmatpush1.msra.mxu0 %v49
    %86 = vmatprep.subr.mxu0 0.0
    %87 = vmatpush1.msra.mxu0 %v50
    %88 = vmatprep.subr.mxu0 0.0
    %89 = vmatpush1.msra.mxu0 %v51
    %90 = vmatprep.subr.mxu0 0.0
    %91 = vmatpush1.msra.mxu0 %v52
    %92 = vmatprep.subr.mxu0 0.0
    %93 = vmatpush1.msra.mxu0 %v53
    %94 = vmatprep.subr.mxu0 0.0
    %95 = vmatpush1.msra.mxu0 %v54
    %96 = vmatprep.subr.mxu0 0.0
    %97 = vmatpush1.msra.mxu0 %v55
    %98 = vmatprep.subr.mxu0 0.0
    %99 = vmatpush1.msra.mxu0 %v56
    %100 = vmatprep.subr.mxu0 0.0
    %101 = vmatpush1.msra.mxu0 %v74
    %102 = vmatprep.subr.mxu0 0.0
    %103 = vmatpush1.msra.mxu0 0.0
    %104 = vmatprep.subr.mxu0 0.0
    %105 = vmatpush1.msra.mxu0 0.0
    %106 = vmatprep.subr.mxu0 0.0
    %107 = vmatpush1.msra.mxu0 0.0
    %108 = vmatprep.subr.mxu0 0.0
    %109 = vmatpush1.msra.mxu0 0.0
    %110 = vmatprep.subr.mxu0 0.0
    %111 = vmatpush1.msra.mxu0 0.0
    %112 = vmatprep.subr.mxu0 0.0
    %113 = vmatpush1.msra.mxu0 0.0
    %114 = vmatprep.subr.mxu0 0.0
    %115 = vmatpush1.msra.mxu0 0.0
    %116 = vmatprep.subr.mxu0 0.0
    %117 = vmatpush1.msra.mxu0 0.0
    %118 = vmatprep.subr.mxu0 0.0
    %119 = vmatpush1.msra.mxu0 0.0
    %120 = vmatprep.subr.mxu0 0.0
    %121 = vmatpush1.msra.mxu0 0.0
    %122 = vmatprep.subr.mxu0 0.0
    %123 = vmatpush1.msra.mxu0 0.0
    %124 = vmatprep.subr.mxu0 0.0
    %125 = vmatpush1.msra.mxu0 0.0
    %126 = vmatprep.subr.mxu0 0.0
    %127 = vmatpush1.msra.mxu0 0.0
    %128 = vmatprep.subr.mxu0 0.0
    %129 = vmatpush1.msra.mxu0 0.0
    %130 = vmatprep.subr.mxu0 0.0
    %131 = vmatpush1.msra.mxu0 0.0
    %132 = vmatprep.subr.mxu0 0.0
    %133 = vmatpush1.msra.mxu0 0.0
    %134 = vmatprep.subr.mxu0 0.0
    %135 = vmatpush1.msra.mxu0 0.0
    %136 = vmatprep.subr.mxu0 0.0
    %137 = vmatpush1.msra.mxu0 0.0
    %138 = vmatprep.subr.mxu0 0.0
    %139 = vmatpush1.msra.mxu0 0.0
    %140 = vmatprep.mubr.f32.mxu0 0.0
    %141 = vmatmul.mubr.f32.gmra.mrb[0].mxu0 %v67
    %v142 = vpop.f32.mrb[0].mxu0
    %v143 = vadd.f32 %v63, %v142
    %v144 = vpop.f32.mrb[0].mxu0
    %145 = vmatprep.mubr.f32.mxu0 0.0
    %146 = vmatmul.mubr.f32.gmra.mrb[0].mxu0 %v70
    %v147 = vpop.f32.mrb[0].mxu0
    %v148 = vadd.f32 %v63, %v147
    %v149 = vpop.f32.mrb[0].mxu0
    %150 = vdwg.mxu0
    %v151 = vmax.f32 %v143, 0.0
    %v152 = vmax.f32 %v148, 0.0
    %153 = vst.msk [vmem:[#allocation7] sm:$0xff] %vm65, %v151
    %154 = vst.msk [vmem:[#allocation7 + $0x8] sm:$0xff] %vm65, %v152
    // Predicated region
    $region22: #{tpu_custom_call.1} parent=1 // pred_check
      _
    $region23: #{tpu_custom_call.1} parent=1 // pred_check_branch
      %156 = sbr.rel (0) target = $region25
    $region24: #{tpu_custom_call.1} parent=1 // pred_region
      %s158 = ssub.s32 256, 256
      %159 = vsyncadd [#allocation4], %s158
      %s160 = sshll.u32 [#allocation7], 4
      %s161 = int_to_ptr.vmem [resolvable:$true] %s160
      %166 = dma.vmem_to_hbm [thread:$0]  %s161, 256, %s3, [#allocation4], 128, 128, 8
    $region25: #{tpu_custom_call.1} parent=1 // pred_fallthru
      _
    // Predicated region
    $region26: #{tpu_custom_call.1} parent=1 // pred_check
      _
    $region27: #{tpu_custom_call.1} parent=1 // pred_check_branch
      %168 = sbr.rel (0) target = $region29
    $region28: #{tpu_custom_call.1} parent=1 // pred_region
      %169 = dma.done [#allocation4], 256
    $region29: #{tpu_custom_call.1} parent=1 // pred_fallthru
      _
    %170 = vsyncpa [#allocation3], 1
    %171 = vsyncpa [#allocation6], 1
    %172 = vsyncpa [#allocation4], 1

</llo_original>
